<compile_context>
chip_gen: v5e
topology: v5e:2x2
jax: 0.10.0
libtpu: 0.0.40
codegen_flags: <defaults>
</compile_context>

<pallas_src>
import functools

import jax
import jax.numpy as jnp
from jax.experimental import pallas as pl
from jax.experimental.pallas import tpu as pltpu


def _forward_block(x_ref, w1t_ref, b1_ref, w2t_ref, b2_ref):
    """Backbone (1x1 conv + ReLU) -> decode head (1x1 conv), fp32 logits.

    Channels live on sublanes, pixels on lanes; both matmuls feed the MXU
    with bf16 operands and fp32 accumulation.
    """
    x = x_ref[0].astype(jnp.bfloat16)                         # (Cin, T)
    h = jnp.dot(w1t_ref[...], x, preferred_element_type=jnp.float32)
    h = jnp.maximum(h + b1_ref[...], 0.0)                     # (hidden, T) fp32
    logits = jnp.dot(w2t_ref[...], h.astype(jnp.bfloat16),
                     preferred_element_type=jnp.float32)
    return logits + b2_ref[...]                               # (K, T) fp32


def _argmax_over_classes(logits):
    """Unrolled running argmax over the small, static class axis.

    Avoids the (K, T) int32 iota and (K, T) select temporaries of a generic
    argmax: only two (1, T) running vectors stay live.  Strict '>' keeps the
    first occurrence on ties, matching torch.argmax / jnp.argmax.
    """
    best = logits[0:1, :]
    best_idx = jnp.zeros((1, logits.shape[1]), jnp.int32)
    for k in range(1, logits.shape[0]):
        row = logits[k:k + 1, :]
        take = row > best
        best = jnp.where(take, row, best)
        best_idx = jnp.where(take, jnp.int32(k), best_idx)
    return best_idx


def _tensor_kernel(x_ref, w1t_ref, b1_ref, w2t_ref, b2_ref,
                   logits_ref, pred_ref):
    logits = _forward_block(x_ref, w1t_ref, b1_ref, w2t_ref, b2_ref)
    logits_ref[0] = logits.astype(logits_ref.dtype)      # bf16 only at the store
    pred_ref[0] = _argmax_over_classes(logits).astype(pred_ref.dtype)


def _pred_only_kernel(x_ref, w1t_ref, b1_ref, w2t_ref, b2_ref, pred_ref):
    # predict-only fast path: skips the logits writeback (~16 B/px of HBM).
    logits = _forward_block(x_ref, w1t_ref, b1_ref, w2t_ref, b2_ref)
    pred_ref[0] = _argmax_over_classes(logits).astype(pred_ref.dtype)


def _device_defaults():
    """(max_tile, vmem_limit_bytes, min_pixel_blocks) per TPU generation."""
    try:
        kind = jax.devices()[0].device_kind.lower()
    except Exception:
        kind = ""
    if "v7" in kind or "7x" in kind:
        # v7x: 64 MiB physical VMEM, 2 TensorCores per chip.
        return 32768, 48 * 1024 * 1024, 2
    # v5e / v6e: 128 MiB physical VMEM, 1 TensorCore.
    return 65536, 64 * 1024 * 1024, 1


@functools.partial(
    jax.jit,
    static_argnames=("logits_dtype", "max_tile", "vmem_limit_bytes",
                     "min_pixel_blocks", "want_logits"))
def _run_segmentor(x_nchw, w1t, b1, w2t, b2, *,
                   logits_dtype=jnp.bfloat16, max_tile=65536,
                   vmem_limit_bytes=64 * 1024 * 1024,
                   min_pixel_blocks=1, want_logits=True):
    n, c, h, w = x_nchw.shape
    hidden = w1t.shape[0]
    num_classes = w2t.shape[0]
    p = h * w

    # NCHW -> (N, C, H*W): pure reshape, no transpose, no extra HBM pass.
    x_ncp = x_nchw.reshape(n, c, p)

    # Lane tile: full pixel row if it fits, else a large multiple of 128.
    # Boundary blocks (cdiv grid) are masked by Pallas; no divisibility assert.
    t_pix = p if p <= max_tile else max_tile
    # v7x only: keep >= 2 pixel blocks when N == 1 so both TensorCores work.
    if n == 1 and min_pixel_blocks > 1 and p > 128:
        cap = ((pl.cdiv(p, min_pixel_blocks) + 127) // 128) * 128
        t_pix = min(t_pix, max(cap, 128))
    grid = (n, pl.cdiv(p, t_pix))

    x_bytes = jnp.dtype(x_ncp.dtype).itemsize
    logit_bytes = jnp.dtype(logits_dtype).itemsize if want_logits else 0
    cost = pl.CostEstimate(
        flops=2 * n * p * (c * hidden + hidden * num_classes),
        transcendentals=0,
        bytes_accessed=(n * p * c * x_bytes                    # input
                        + n * p * num_classes * logit_bytes    # logits out
                        + n * p * 1                            # int8 pred out
                        + (hidden * c + num_classes * hidden) * 2
                        + (hidden + num_classes) * 4))

    in_specs = [
        pl.BlockSpec((1, c, t_pix), lambda nb, pb: (nb, 0, pb)),
        pl.BlockSpec((hidden, c), lambda nb, pb: (0, 0)),
        pl.BlockSpec((hidden, 1), lambda nb, pb: (0, 0)),
        pl.BlockSpec((num_classes, hidden), lambda nb, pb: (0, 0)),
        pl.BlockSpec((num_classes, 1), lambda nb, pb: (0, 0)),
    ]
    pred_shape = jax.ShapeDtypeStruct((n, 1, p), jnp.int8)
    pred_spec = pl.BlockSpec((1, 1, t_pix), lambda nb, pb: (nb, 0, pb))

    if want_logits:
        kernel = _tensor_kernel
        out_shape = (jax.ShapeDtypeStruct((n, num_classes, p), logits_dtype),
                     pred_shape)
        out_specs = [
            pl.BlockSpec((1, num_classes, t_pix), lambda nb, pb: (nb, 0, pb)),
            pred_spec,
        ]
    else:
        kernel = _pred_only_kernel
        out_shape = pred_shape
        out_specs = pred_spec

    outs = pl.pallas_call(
        kernel,
        out_shape=out_shape,
        grid_spec=pltpu.PrefetchScalarGridSpec(
            num_scalar_prefetch=0,
            grid=grid,
            in_specs=in_specs,
            out_specs=out_specs,
        ),
        compiler_params=pltpu.CompilerParams(
            dimension_semantics=("parallel", "parallel"),
            vmem_limit_bytes=vmem_limit_bytes),
        cost_estimate=cost,
    )(x_ncp, w1t, b1, w2t, b2)

    # (N, K, H*W) -> (N, K, H, W), (N, 1, H*W) -> (N, H, W): reshapes only;
    # outputs already land in NCHW order.
    if want_logits:
        logits_ncp, pred_n1p = outs
        return logits_ncp.reshape(n, num_classes, h, w), pred_n1p.reshape(n, h, w)
    return None, outs.reshape(n, h, w)


class BaseSegmentorPallas:
    """Concrete Pallas realization of BaseSegmentor's forward dispatch."""

    def __init__(self, in_channels=4, hidden=32, num_classes=8,
                 logits_dtype=jnp.bfloat16):
        k1, k2 = jax.random.split(jax.random.PRNGKey(42))
        # Output-major ("transposed") weights, stored bf16 (MXU-native), so
        # the pixels-on-lanes kernel needs no in-kernel transposes.
        self.w1t = (jax.random.normal(k1, (hidden, in_channels), jnp.float32)
                    * (1.0 / jnp.sqrt(in_channels))).astype(jnp.bfloat16)
        self.b1 = jnp.zeros((hidden, 1), jnp.float32)
        self.w2t = (jax.random.normal(k2, (num_classes, hidden), jnp.float32)
                    * (1.0 / jnp.sqrt(hidden))).astype(jnp.bfloat16)
        self.b2 = jnp.zeros((num_classes, 1), jnp.float32)
        self.num_classes = num_classes
        self.logits_dtype = logits_dtype
        (self.max_tile, self.vmem_limit_bytes,
         self.min_pixel_blocks) = _device_defaults()

    def _run(self, inputs, *, logits_dtype=None, want_logits=True):
        return _run_segmentor(
            inputs, self.w1t, self.b1, self.w2t, self.b2,
            logits_dtype=(self.logits_dtype if logits_dtype is None
                          else logits_dtype),
            max_tile=self.max_tile,
            vmem_limit_bytes=self.vmem_limit_bytes,
            min_pixel_blocks=self.min_pixel_blocks,
            want_logits=want_logits)

    # ---- BaseSegmentor API -------------------------------------------------
    def _forward(self, inputs, data_samples=None):
        seg_logits, _ = self._run(inputs)
        return seg_logits

    def predict(self, inputs, data_samples=None, return_logits=True):
        # return_logits=False is the fast path that skips the seg_logits
        # writeback (~45% fewer HBM bytes) when only pred_sem_seg is needed.
        seg_logits, pred = self._run(inputs, want_logits=return_logits)
        return self.postprocess_result(seg_logits, pred, data_samples)

    def postprocess_result(self, seg_logits, pred_sem_seg, data_samples=None):
        # List of per-image "SegDataSample"-like dicts.  Note: seg_logits are
        # bf16 while pred_sem_seg was argmaxed on fp32 logits in-kernel.
        results = []
        for i in range(pred_sem_seg.shape[0]):
            sample = {"pred_sem_seg": pred_sem_seg[i]}
            if seg_logits is not None:
                sample["seg_logits"] = seg_logits[i]
            results.append(sample)
        return results

    def loss(self, inputs, data_samples):
        # TODO(synk): `loss` is abstract in BaseSegmentor; simple CE stand-in.
        # Uses fp32 kernel logits (no bf16 round trip before log_softmax).
        seg_logits, _ = self._run(inputs, logits_dtype=jnp.float32)
        gt = data_samples  # (N, H, W) int labels
        logp = jax.nn.log_softmax(seg_logits, axis=1)
        nll = -jnp.take_along_axis(logp, gt[:, None, :, :], axis=1)
        return {"loss_ce": jnp.mean(nll)}

    def forward(self, inputs, data_samples=None, mode="tensor"):
        if mode == "loss":
            return self.loss(inputs, data_samples)
        elif mode == "predict":
            return self.predict(inputs, data_samples)
        elif mode == "tensor":
            return self._forward(inputs, data_samples)
        else:
            raise RuntimeError(
                f'Invalid mode "{mode}". Only supports loss, predict and tensor mode')


if __name__ == "__main__":
    key = jax.random.PRNGKey(0)
    N, C, H, W = 2, 4, 16, 16
    K = 8
    x = jax.random.normal(key, (N, C, H, W), jnp.float32)

    model = BaseSegmentorPallas(in_channels=C, hidden=32, num_classes=K)

    # mode="tensor"
    seg_logits = model.forward(x, mode="tensor")
    jax.block_until_ready(seg_logits)
    assert seg_logits.shape == (N, K, H, W)

    # mode="predict" (full SegDataSample: logits + pred)
    results = model.forward(x, mode="predict")
    jax.block_until_ready(results[0]["pred_sem_seg"])
    assert results[0]["pred_sem_seg"].shape == (H, W)
    assert results[0]["seg_logits"].shape == (K, H, W)

    # predict-only fast path (skips the logits writeback)
    results_fast = model.predict(x, return_logits=False)
    jax.block_until_ready(results_fast[0]["pred_sem_seg"])

    # mode="loss" (fp32-logits kernel instance)
    gt = jax.random.randint(jax.random.PRNGKey(1), (N, H, W), 0, K)
    losses = model.forward(x, gt, mode="loss")
    jax.block_until_ready(losses["loss_ce"])
    assert bool(jnp.isfinite(losses["loss_ce"]))

    # Plain-JAX reference mirroring the kernel's rounding (bf16 operands into
    # fp32-accumulating matmuls); transposes exist only here, in the test.
    x_flat = jnp.transpose(x, (0, 2, 3, 1)).reshape(-1, C).astype(jnp.bfloat16)
    h_ref = jnp.dot(x_flat, model.w1t.T, preferred_element_type=jnp.float32)
    h_ref = jnp.maximum(h_ref + model.b1.reshape(1, -1), 0.0)
    logits_flat = jnp.dot(h_ref.astype(jnp.bfloat16), model.w2t.T,
                          preferred_element_type=jnp.float32)
    logits_flat = logits_flat + model.b2.reshape(1, -1)
    logits_ref = jnp.transpose(logits_flat.reshape(N, H, W, K), (0, 3, 1, 2))

    # Logits are cast to bf16 only at the final store -> bf16 tolerance.
    assert jnp.allclose(seg_logits.astype(jnp.float32), logits_ref,
                        atol=5e-2, rtol=5e-2)

    # Argmax runs on fp32 logits inside the kernel -> matches the fp32 ref.
    ref_pred = jnp.argmax(logits_ref, axis=1).astype(jnp.int32)
    pred_stack = jnp.stack(
        [r["pred_sem_seg"] for r in results]).astype(jnp.int32)
    assert jnp.array_equal(pred_stack, ref_pred)
    pred_fast = jnp.stack(
        [r["pred_sem_seg"] for r in results_fast]).astype(jnp.int32)
    assert jnp.array_equal(pred_fast, ref_pred)

    print("KERNEL_OK")
</pallas_src>

<mosaic_0001>
module attributes {stable_mosaic.version = 11 : i64} {
  func.func @_tensor_kernel(%arg0: i32, %arg1: i32, %arg2: memref<1x4x256xf32, #tpu.memory_space<vmem>>, %arg3: memref<32x4xbf16, #tpu.memory_space<vmem>>, %arg4: memref<32x1xf32, #tpu.memory_space<vmem>>, %arg5: memref<8x32xbf16, #tpu.memory_space<vmem>>, %arg6: memref<8x1xf32, #tpu.memory_space<vmem>>, %arg7: memref<1x8x256xbf16, #tpu.memory_space<vmem>>, %arg8: memref<1x1x256xi8, #tpu.memory_space<vmem>>) attributes {dimension_semantics = [#tpu.dimension_semantics<parallel>, #tpu.dimension_semantics<parallel>], iteration_bounds = array<i64: 2, 1>, scalar_prefetch = 0 : i64, scratch_operands = 0 : i64, tpu.core_type = #tpu.core_type<tc>, window_params = [{transform_indices = @transform_0, window_bounds = array<i64: 1, 4, 256>}, {pipeline_mode = #tpu.pipeline_mode<synchronous>, transform_indices = @transform_1, window_bounds = array<i64: 32, 4>}, {pipeline_mode = #tpu.pipeline_mode<synchronous>, transform_indices = @transform_2, window_bounds = array<i64: 32, 1>}, {pipeline_mode = #tpu.pipeline_mode<synchronous>, transform_indices = @transform_3, window_bounds = array<i64: 8, 32>}, {pipeline_mode = #tpu.pipeline_mode<synchronous>, transform_indices = @transform_4, window_bounds = array<i64: 8, 1>}, {transform_indices = @transform_5, window_bounds = array<i64: 1, 8, 256>}, {transform_indices = @transform_6, window_bounds = array<i64: 1, 1, 256>}]} {
    %c0 = arith.constant 0 : index
    %c0_0 = arith.constant 0 : index
    %c0_1 = arith.constant 0 : index
    %0 = vector.load %arg2[%c0, %c0_0, %c0_1] : memref<1x4x256xf32, #tpu.memory_space<vmem>>, vector<1x4x256xf32>
    %1 = vector.shape_cast %0 : vector<1x4x256xf32> to vector<4x256xf32>
    %2 = arith.truncf %1 : vector<4x256xf32> to vector<4x256xbf16>
    %c0_2 = arith.constant 0 : index
    %c0_3 = arith.constant 0 : index
    %3 = vector.load %arg3[%c0_2, %c0_3] : memref<32x4xbf16, #tpu.memory_space<vmem>>, vector<32x4xbf16>
    %cst = arith.constant dense<0.000000e+00> : vector<32x256xf32>
    %4 = tpu.matmul %3, %2, %cst {dimension_numbers = #tpu.dot_dimension_numbers<[1], [0], [0], [1], [0, 0, 1, 1], [], []>} : vector<32x4xbf16>, vector<4x256xbf16>, vector<32x256xf32> -> vector<32x256xf32>
    %c0_4 = arith.constant 0 : index
    %c0_5 = arith.constant 0 : index
    %5 = vector.load %arg4[%c0_4, %c0_5] : memref<32x1xf32, #tpu.memory_space<vmem>>, vector<32x1xf32>
    %6 = vector.broadcast %5 : vector<32x1xf32> to vector<32x256xf32>
    %7 = arith.addf %4, %6 : vector<32x256xf32>
    %cst_6 = arith.constant 0.000000e+00 : f32
    %8 = vector.broadcast %cst_6 : f32 to vector<32x256xf32>
    %9 = arith.maximumf %7, %8 : vector<32x256xf32>
    %c0_7 = arith.constant 0 : index
    %c0_8 = arith.constant 0 : index
    %10 = vector.load %arg5[%c0_7, %c0_8] : memref<8x32xbf16, #tpu.memory_space<vmem>>, vector<8x32xbf16>
    %11 = arith.truncf %9 : vector<32x256xf32> to vector<32x256xbf16>
    %cst_9 = arith.constant dense<0.000000e+00> : vector<8x256xf32>
    %12 = tpu.matmul %10, %11, %cst_9 {dimension_numbers = #tpu.dot_dimension_numbers<[1], [0], [0], [1], [0, 0, 1, 1], [], []>} : vector<8x32xbf16>, vector<32x256xbf16>, vector<8x256xf32> -> vector<8x256xf32>
    %c0_10 = arith.constant 0 : index
    %c0_11 = arith.constant 0 : index
    %13 = vector.load %arg6[%c0_10, %c0_11] : memref<8x1xf32, #tpu.memory_space<vmem>>, vector<8x1xf32>
    %14 = vector.broadcast %13 : vector<8x1xf32> to vector<8x256xf32>
    %15 = arith.addf %12, %14 : vector<8x256xf32>
    %16 = arith.truncf %15 : vector<8x256xf32> to vector<8x256xbf16>
    %c0_12 = arith.constant 0 : index
    %c0_13 = arith.constant 0 : index
    %c0_14 = arith.constant 0 : index
    %17 = vector.load %arg7[%c0_12, %c0_13, %c0_14] : memref<1x8x256xbf16, #tpu.memory_space<vmem>>, vector<1x8x256xbf16>
    %18 = vector.shape_cast %17 : vector<1x8x256xbf16> to vector<8x256xbf16>
    %19 = vector.shape_cast %16 : vector<8x256xbf16> to vector<1x8x256xbf16>
    tpu.vector_store %arg7[%c0_12, %c0_13, %c0_14], %19 {strides = array<i32>} : memref<1x8x256xbf16, #tpu.memory_space<vmem>>, vector<1x8x256xbf16>,
    %20 = vector.extract_strided_slice %15 {offsets = [0, 0], sizes = [1, 256], strides = [1, 1]} : vector<8x256xf32> to vector<1x256xf32>
    %c0_i32 = arith.constant 0 : i32
    %21 = vector.broadcast %c0_i32 : i32 to vector<1x256xi32>
    %22 = vector.extract_strided_slice %15 {offsets = [1, 0], sizes = [1, 256], strides = [1, 1]} : vector<8x256xf32> to vector<1x256xf32>
    %23 = arith.cmpf ogt, %22, %20 : vector<1x256xf32>
    %24 = arith.select %23, %22, %20 : vector<1x256xi1>, vector<1x256xf32>
    %c1_i32 = arith.constant 1 : i32
    %25 = vector.broadcast %c1_i32 : i32 to vector<1x256xi32>
    %26 = arith.select %23, %25, %21 : vector<1x256xi1>, vector<1x256xi32>
    %27 = vector.extract_strided_slice %15 {offsets = [2, 0], sizes = [1, 256], strides = [1, 1]} : vector<8x256xf32> to vector<1x256xf32>
    %28 = arith.cmpf ogt, %27, %24 : vector<1x256xf32>
    %29 = arith.select %28, %27, %24 : vector<1x256xi1>, vector<1x256xf32>
    %c2_i32 = arith.constant 2 : i32
    %30 = vector.broadcast %c2_i32 : i32 to vector<1x256xi32>
    %31 = arith.select %28, %30, %26 : vector<1x256xi1>, vector<1x256xi32>
    %32 = vector.extract_strided_slice %15 {offsets = [3, 0], sizes = [1, 256], strides = [1, 1]} : vector<8x256xf32> to vector<1x256xf32>
    %33 = arith.cmpf ogt, %32, %29 : vector<1x256xf32>
    %34 = arith.select %33, %32, %29 : vector<1x256xi1>, vector<1x256xf32>
    %c3_i32 = arith.constant 3 : i32
    %35 = vector.broadcast %c3_i32 : i32 to vector<1x256xi32>
    %36 = arith.select %33, %35, %31 : vector<1x256xi1>, vector<1x256xi32>
    %37 = vector.extract_strided_slice %15 {offsets = [4, 0], sizes = [1, 256], strides = [1, 1]} : vector<8x256xf32> to vector<1x256xf32>
    %38 = arith.cmpf ogt, %37, %34 : vector<1x256xf32>
    %39 = arith.select %38, %37, %34 : vector<1x256xi1>, vector<1x256xf32>
    %c4_i32 = arith.constant 4 : i32
    %40 = vector.broadcast %c4_i32 : i32 to vector<1x256xi32>
    %41 = arith.select %38, %40, %36 : vector<1x256xi1>, vector<1x256xi32>
    %42 = vector.extract_strided_slice %15 {offsets = [5, 0], sizes = [1, 256], strides = [1, 1]} : vector<8x256xf32> to vector<1x256xf32>
    %43 = arith.cmpf ogt, %42, %39 : vector<1x256xf32>
    %44 = arith.select %43, %42, %39 : vector<1x256xi1>, vector<1x256xf32>
    %c5_i32 = arith.constant 5 : i32
    %45 = vector.broadcast %c5_i32 : i32 to vector<1x256xi32>
    %46 = arith.select %43, %45, %41 : vector<1x256xi1>, vector<1x256xi32>
    %47 = vector.extract_strided_slice %15 {offsets = [6, 0], sizes = [1, 256], strides = [1, 1]} : vector<8x256xf32> to vector<1x256xf32>
    %48 = arith.cmpf ogt, %47, %44 : vector<1x256xf32>
    %49 = arith.select %48, %47, %44 : vector<1x256xi1>, vector<1x256xf32>
    %c6_i32 = arith.constant 6 : i32
    %50 = vector.broadcast %c6_i32 : i32 to vector<1x256xi32>
    %51 = arith.select %48, %50, %46 : vector<1x256xi1>, vector<1x256xi32>
    %52 = vector.extract_strided_slice %15 {offsets = [7, 0], sizes = [1, 256], strides = [1, 1]} : vector<8x256xf32> to vector<1x256xf32>
    %53 = arith.cmpf ogt, %52, %49 : vector<1x256xf32>
    %c7_i32 = arith.constant 7 : i32
    %54 = vector.broadcast %c7_i32 : i32 to vector<1x256xi32>
    %55 = arith.select %53, %54, %51 : vector<1x256xi1>, vector<1x256xi32>
    %56 = arith.trunci %55 : vector<1x256xi32> to vector<1x256xi8>
    %c0_15 = arith.constant 0 : index
    %c0_16 = arith.constant 0 : index
    %c0_17 = arith.constant 0 : index
    %57 = vector.load %arg8[%c0_15, %c0_16, %c0_17] : memref<1x1x256xi8, #tpu.memory_space<vmem>>, vector<1x1x256xi8>
    %58 = vector.shape_cast %57 : vector<1x1x256xi8> to vector<1x256xi8>
    %59 = vector.shape_cast %56 : vector<1x256xi8> to vector<1x1x256xi8>
    tpu.vector_store %arg8[%c0_15, %c0_16, %c0_17], %59 {strides = array<i32>} : memref<1x1x256xi8, #tpu.memory_space<vmem>>, vector<1x1x256xi8>,
    return
  }
  func.func @transform_0(%arg0: i32, %arg1: i32) -> (i32, i32, i32) {
    %c0_i32 = arith.constant 0 : i32
    %c0_i32_0 = arith.constant 0 : i32
    return %arg0, %c0_i32, %arg1 : i32, i32, i32
  }
  func.func @transform_1(%arg0: i32, %arg1: i32) -> (i32, i32) {
    %c0_i32 = arith.constant 0 : i32
    %c0_i32_0 = arith.constant 0 : i32
    %c0_i32_1 = arith.constant 0 : i32
    return %c0_i32, %c0_i32_0 : i32, i32
  }
  func.func @transform_2(%arg0: i32, %arg1: i32) -> (i32, i32) {
    %c0_i32 = arith.constant 0 : i32
    %c0_i32_0 = arith.constant 0 : i32
    %c0_i32_1 = arith.constant 0 : i32
    return %c0_i32, %c0_i32_0 : i32, i32
  }
  func.func @transform_3(%arg0: i32, %arg1: i32) -> (i32, i32) {
    %c0_i32 = arith.constant 0 : i32
    %c0_i32_0 = arith.constant 0 : i32
    %c0_i32_1 = arith.constant 0 : i32
    return %c0_i32, %c0_i32_0 : i32, i32
  }
  func.func @transform_4(%arg0: i32, %arg1: i32) -> (i32, i32) {
    %c0_i32 = arith.constant 0 : i32
    %c0_i32_0 = arith.constant 0 : i32
    %c0_i32_1 = arith.constant 0 : i32
    return %c0_i32, %c0_i32_0 : i32, i32
  }
  func.func @transform_5(%arg0: i32, %arg1: i32) -> (i32, i32, i32) {
    %c0_i32 = arith.constant 0 : i32
    %c0_i32_0 = arith.constant 0 : i32
    return %arg0, %c0_i32, %arg1 : i32, i32, i32
  }
  func.func @transform_6(%arg0: i32, %arg1: i32) -> (i32, i32, i32) {
    %c0_i32 = arith.constant 0 : i32
    %c0_i32_0 = arith.constant 0 : i32
    return %arg0, %c0_i32, %arg1 : i32, i32, i32
  }
}

</mosaic_0001>

<llo_original>
// kernel: _run_segmentor.1
$region0: #{_run_segmentor.1}
  #allocation0 [shape = 'u32[]', space=smem, size = 0x4, offset = 0x4, fixed_abs, tag = 'smem constant byte address 0x4 - core index']
  #allocation1 [shape = 'u32[72,128]{1,0:T(1,128)}', space=vmem, size = 0x9000, scoped, tag = 'internal scratch']
  %s0 = inlined_call_operand.vmem [shape: f32[2,4,256], index: 0, kind: input, shape index: {}]
  %s1 = inlined_call_operand.vmem [shape: bf16[32,4], index: 1, kind: input, shape index: {}]
  %s2 = inlined_call_operand.vmem [shape: f32[32,1], index: 2, kind: input, shape index: {}]
  %s3 = inlined_call_operand.vmem [shape: bf16[8,32], index: 3, kind: input, shape index: {}]
  %s4 = inlined_call_operand.vmem [shape: f32[8,1], index: 4, kind: input, shape index: {}]
  %s5 = inlined_call_operand.vmem [shape: bf16[2,8,256], index: 5, kind: output, shape index: {0}]
  %s6 = inlined_call_operand.vmem [shape: s8[2,1,256], index: 6, kind: output, shape index: {1}]
  %7 = xla_tuple %s5, %s6
  %s8 = sld [smem:[#allocation0]]
  $region61: #{_run_segmentor.1} parent=0
    _
  %s10 = ssub.s32 1, %s8
  %s11 = scalar_select 0, %s10, %s8
  loop: start=0, step=1, limit=4
  $region2: #{_run_segmentor.1} parent=0 // loop_pre_header
    _
  $region3: #{_run_segmentor.1} parent=0 // loop_header
    %s13 = sphi 0, %s17
    %p14 = scmp.ge.s32.totalorder %s13, 4
    %s20 = sphi 0, %s32
    %s21 = sphi 0, %s28
    %s22 = sphi 0, %s20
    %s23 = sphi 0, %s21
    %s24 = sphi 0, %s22
    %s25 = sphi 0, %s23
    %s37 = sphi 0, %s39
    %s40 = sphi 0, %s37
    %s41 = sphi 0, %s40
    %s57 = sphi 0, %s41
    %s61 = sphi 0, %s61
    %s63 = sphi 0, %s61
    %s64 = sphi 0, %s63
    %s78 = sphi 0, %s64
    %s82 = sphi 0, %s82
    %s84 = sphi 0, %s82
    %s85 = sphi 0, %s84
    %s99 = sphi 0, %s85
    %s103 = sphi 0, %s103
    %s105 = sphi 0, %s103
    %s106 = sphi 0, %s105
    %s120 = sphi 0, %s106
    %s124 = sphi 0, %s124
    %s126 = sphi 0, %s124
    %s127 = sphi 0, %s126
    %s141 = sphi 0, %s127
    %s149 = sphi 0, %s151
    %s152 = sphi 0, %s149
    %s153 = sphi 0, %s152
    %s169 = sphi 0, %s153
    %s177 = sphi 0, %s179
    %s180 = sphi 0, %s177
    %s181 = sphi 0, %s180
    %s197 = sphi 0, %s181
  $region4: #{_run_segmentor.1} parent=0 // loop_header_branch
    %16 = sbr.rel (%p14) target = $region8
  $region5: #{_run_segmentor.1} parent=0 // loop_body
    %s18 = ssub.s32 %s13, 1
    %s19 = ssub.s32 %s13, 2
    %s26 = sadd.s32 1, %s21
    %p27 = scmp.ge.s32.totalorder %s26, 1
    %s28 = scalar_select %p27, 0, %s26
    %s29 = sadd.s32 1, %s20
    %s30 = scalar_select %p27, %s29, %s20
    %p31 = scmp.ge.s32.totalorder %s30, 2
    %s32 = scalar_select %p31, 0, %s30
    %s33 = ssub.s32 %s20, %s32
    %s34 = ssub.s32 %s21, %s28
    %s35 = sor.u32 %s33, %s34
    %p36 = scmp.eq.s32.totalorder %s35, 0
    %s38 = sadd.s32 %s37, 1
    %s39 = scalar_select %p36, %s37, %s38
    %p42 = pneg %p36
    %p43 = scmp.eq.s32.totalorder %s13, 1
    %p44 = por %p42, %p43
    %p45 = scmp.ne.s32.totalorder %s37, %s40
    %p46 = scmp.eq.s32.totalorder %s13, 0
    %p47 = por %p45, %p46
    %p48 = scmp.ne.s32.totalorder %s37, %s40
    %p49 = scmp.eq.s32.totalorder %s18, 1
    %p50 = por %p48, %p49
    %p51 = scmp.ne.s32.totalorder %s40, %s41
    %p52 = scmp.eq.s32.totalorder %s18, 0
    %p53 = por %p51, %p52
    %p54 = scmp.ne.s32.totalorder %s40, %s41
    %p55 = scmp.eq.s32.totalorder %s19, 1
    %p56 = por %p54, %p55
    %p58 = scmp.ne.s32.totalorder %s41, %s57
    %p59 = scmp.eq.s32.totalorder %s19, 0
    %p60 = por %p58, %p59
    %s62 = sadd.s32 %s61, 1
    %p65 = scmp.eq.s32.totalorder %s13, 1
    %p66 = scmp.ne.s32.totalorder %s61, %s63
    %p67 = scmp.eq.s32.totalorder %s13, 0
    %p68 = por %p66, %p67
    %p69 = scmp.ne.s32.totalorder %s61, %s63
    %p70 = scmp.eq.s32.totalorder %s18, 1
    %p71 = por %p69, %p70
    %p72 = scmp.ne.s32.totalorder %s63, %s64
    %p73 = scmp.eq.s32.totalorder %s18, 0
    %p74 = por %p72, %p73
    %p75 = scmp.ne.s32.totalorder %s63, %s64
    %p76 = scmp.eq.s32.totalorder %s19, 1
    %p77 = por %p75, %p76
    %p79 = scmp.ne.s32.totalorder %s64, %s78
    %p80 = scmp.eq.s32.totalorder %s19, 0
    %p81 = por %p79, %p80
    %s83 = sadd.s32 %s82, 1
    %p86 = scmp.eq.s32.totalorder %s13, 1
    %p87 = scmp.ne.s32.totalorder %s82, %s84
    %p88 = scmp.eq.s32.totalorder %s13, 0
    %p89 = por %p87, %p88
    %p90 = scmp.ne.s32.totalorder %s82, %s84
    %p91 = scmp.eq.s32.totalorder %s18, 1
    %p92 = por %p90, %p91
    %p93 = scmp.ne.s32.totalorder %s84, %s85
    %p94 = scmp.eq.s32.totalorder %s18, 0
    %p95 = por %p93, %p94
    %p96 = scmp.ne.s32.totalorder %s84, %s85
    %p97 = scmp.eq.s32.totalorder %s19, 1
    %p98 = por %p96, %p97
    %p100 = scmp.ne.s32.totalorder %s85, %s99
    %p101 = scmp.eq.s32.totalorder %s19, 0
    %p102 = por %p100, %p101
    %s104 = sadd.s32 %s103, 1
    %p107 = scmp.eq.s32.totalorder %s13, 1
    %p108 = scmp.ne.s32.totalorder %s103, %s105
    %p109 = scmp.eq.s32.totalorder %s13, 0
    %p110 = por %p108, %p109
    %p111 = scmp.ne.s32.totalorder %s103, %s105
    %p112 = scmp.eq.s32.totalorder %s18, 1
    %p113 = por %p111, %p112
    %p114 = scmp.ne.s32.totalorder %s105, %s106
    %p115 = scmp.eq.s32.totalorder %s18, 0
    %p116 = por %p114, %p115
    %p117 = scmp.ne.s32.totalorder %s105, %s106
    %p118 = scmp.eq.s32.totalorder %s19, 1
    %p119 = por %p117, %p118
    %p121 = scmp.ne.s32.totalorder %s106, %s120
    %p122 = scmp.eq.s32.totalorder %s19, 0
    %p123 = por %p121, %p122
    %s125 = sadd.s32 %s124, 1
    %p128 = scmp.eq.s32.totalorder %s13, 1
    %p129 = scmp.ne.s32.totalorder %s124, %s126
    %p130 = scmp.eq.s32.totalorder %s13, 0
    %p131 = por %p129, %p130
    %p132 = scmp.ne.s32.totalorder %s124, %s126
    %p133 = scmp.eq.s32.totalorder %s18, 1
    %p134 = por %p132, %p133
    %p135 = scmp.ne.s32.totalorder %s126, %s127
    %p136 = scmp.eq.s32.totalorder %s18, 0
    %p137 = por %p135, %p136
    %p138 = scmp.ne.s32.totalorder %s126, %s127
    %p139 = scmp.eq.s32.totalorder %s19, 1
    %p140 = por %p138, %p139
    %p142 = scmp.ne.s32.totalorder %s127, %s141
    %p143 = scmp.eq.s32.totalorder %s19, 0
    %p144 = por %p142, %p143
    %s145 = ssub.s32 %s20, %s32
    %s146 = ssub.s32 %s21, %s28
    %s147 = sor.u32 %s145, %s146
    %p148 = scmp.eq.s32.totalorder %s147, 0
    %s150 = sadd.s32 %s149, 1
    %s151 = scalar_select %p148, %s149, %s150
    %p154 = pneg %p148
    %p155 = scmp.eq.s32.totalorder %s13, 1
    %p156 = por %p154, %p155
    %p157 = scmp.ne.s32.totalorder %s149, %s152
    %p158 = scmp.eq.s32.totalorder %s13, 0
    %p159 = por %p157, %p158
    %p160 = scmp.ne.s32.totalorder %s149, %s152
    %p161 = scmp.eq.s32.totalorder %s18, 1
    %p162 = por %p160, %p161
    %p163 = scmp.ne.s32.totalorder %s152, %s153
    %p164 = scmp.eq.s32.totalorder %s18, 0
    %p165 = por %p163, %p164
    %p166 = scmp.ne.s32.totalorder %s152, %s153
    %p167 = scmp.eq.s32.totalorder %s19, 1
    %p168 = por %p166, %p167
    %p170 = scmp.ne.s32.totalorder %s153, %s169
    %p171 = scmp.eq.s32.totalorder %s19, 0
    %p172 = por %p170, %p171
    %s173 = ssub.s32 %s20, %s32
    %s174 = ssub.s32 %s21, %s28
    %s175 = sor.u32 %s173, %s174
    %p176 = scmp.eq.s32.totalorder %s175, 0
    %s178 = sadd.s32 %s177, 1
    %s179 = scalar_select %p176, %s177, %s178
    %p182 = pneg %p176
    %p183 = scmp.eq.s32.totalorder %s13, 1
    %p184 = por %p182, %p183
    %p185 = scmp.ne.s32.totalorder %s177, %s180
    %p186 = scmp.eq.s32.totalorder %s13, 0
    %p187 = por %p185, %p186
    %p188 = scmp.ne.s32.totalorder %s177, %s180
    %p189 = scmp.eq.s32.totalorder %s18, 1
    %p190 = por %p188, %p189
    %p191 = scmp.ne.s32.totalorder %s180, %s181
    %p192 = scmp.eq.s32.totalorder %s18, 0
    %p193 = por %p191, %p192
    %p194 = scmp.ne.s32.totalorder %s180, %s181
    %p195 = scmp.eq.s32.totalorder %s19, 1
    %p196 = por %p194, %p195
    %p198 = scmp.ne.s32.totalorder %s181, %s197
    %p199 = scmp.eq.s32.totalorder %s19, 0
    %p200 = por %p198, %p199
    %p201 = scmp.le.s32.totalorder 1, %s13
    %p202 = scmp.lt.s32.totalorder %s13, 3
    %p203 = pnand %p201, %p202
    %p204 = pneg %p203
    // Predicated region
    $region9: #{_run_segmentor.1} parent=5 // pred_check
      _
    $region10: #{_run_segmentor.1} parent=5 // pred_check_branch
      %206 = sbr.rel (%p203) target = $region12
    $region11: #{_run_segmentor.1} parent=5 // pred_region
      %s207 = ssub.s32 %s13, 1
      // Predicated region
      $region13: #{_run_segmentor.1} parent=11 // pred_check
        %p208 = pneg %p74
      $region14: #{_run_segmentor.1} parent=11 // pred_check_branch
        %210 = sbr.rel (%p208) target = $region16
      $region15: #{_run_segmentor.1} parent=11 // pred_region
        _
      $region16: #{_run_segmentor.1} parent=11 // pred_fallthru
        _
      // Predicated region
      $region17: #{_run_segmentor.1} parent=11 // pred_check
        %p211 = pneg %p95
      $region18: #{_run_segmentor.1} parent=11 // pred_check_branch
        %213 = sbr.rel (%p211) target = $region20
      $region19: #{_run_segmentor.1} parent=11 // pred_region
        _
      $region20: #{_run_segmentor.1} parent=11 // pred_fallthru
        _
      // Predicated region
      $region21: #{_run_segmentor.1} parent=11 // pred_check
        %p214 = pneg %p116
      $region22: #{_run_segmentor.1} parent=11 // pred_check_branch
        %216 = sbr.rel (%p214) target = $region24
      $region23: #{_run_segmentor.1} parent=11 // pred_region
        _
      $region24: #{_run_segmentor.1} parent=11 // pred_fallthru
        _
      // Predicated region
      $region25: #{_run_segmentor.1} parent=11 // pred_check
        %p217 = pneg %p137
      $region26: #{_run_segmentor.1} parent=11 // pred_check_branch
        %219 = sbr.rel (%p217) target = $region28
      $region27: #{_run_segmentor.1} parent=11 // pred_region
        _
      $region28: #{_run_segmentor.1} parent=11 // pred_fallthru
        _
    $region12: #{_run_segmentor.1} parent=5 // pred_fallthru
      _
    %p220 = scmp.lt.s32.totalorder %s13, 2
    // Predicated region
    $region29: #{_run_segmentor.1} parent=5 // pred_check
      %p221 = pneg %p220
    $region30: #{_run_segmentor.1} parent=5 // pred_check_branch
      %223 = sbr.rel (%p221) target = $region32
    $region31: #{_run_segmentor.1} parent=5 // pred_region
      // Predicated region
      $region33: #{_run_segmentor.1} parent=31 // pred_check
        %p224 = pneg %p47
      $region34: #{_run_segmentor.1} parent=31 // pred_check_branch
        %226 = sbr.rel (%p224) target = $region36
      $region35: #{_run_segmentor.1} parent=31 // pred_region
        %s227 = smul.u32 2, %s21
        %p228 = scmp.lt.s32.totalorder %s20, 1
        %s229 = scalar_select %p228, %s20, 1
        %p230 = scmp.lt.s32.totalorder %s227, 1
        %s231 = scalar_select %p230, %s227, 1
        %s232 = smul.addr %s229, 2
        %s233 = sadd.s32 %s231, %s232
        %s234 = smul.addr %s233, 4
        %s235 = scalar_lea.vmem %s0, %s234
        %s236 = smul.u32 2, %s21
      $region36: #{_run_segmentor.1} parent=31 // pred_fallthru
        _
    $region32: #{_run_segmentor.1} parent=5 // pred_fallthru
      _
    %p237 = scmp.le.s32.totalorder 1, %s13
    %p238 = scmp.lt.s32.totalorder %s13, 3
    %p239 = pnand %p237, %p238
    %p240 = pneg %p239
    // Predicated region
    $region37: #{_run_segmentor.1} parent=5 // pred_check
      _
    $region38: #{_run_segmentor.1} parent=5 // pred_check_branch
      %242 = sbr.rel (%p239) target = $region40
    $region39: #{_run_segmentor.1} parent=5 // pred_region
      %s243 = ssub.s32 %s13, 1
      %s244 = smul.u32 2, %s23
      %p245 = scmp.lt.s32.totalorder %s22, 1
      %s246 = scalar_select %p245, %s22, 1
      %p247 = scmp.lt.s32.totalorder %s244, 1
      %s248 = scalar_select %p247, %s244, 1
      %s249 = smul.addr %s246, 2
      %s250 = sadd.s32 %s248, %s249
      %s251 = smul.addr %s250, 4
      %s252 = scalar_lea.vmem %s0, %s251
      %p253 = pneg %p53
      %p254 = pneg %p50
      %p255 = pneg %p74
      %p256 = pneg %p71
      %p257 = pneg %p95
      %p258 = pneg %p92
      %p259 = pneg %p116
      %p260 = pneg %p113
      %p261 = pneg %p137
      %p262 = pneg %p134
      %p263 = pneg %p165
      %p264 = pneg %p162
      %s265 = smul.u32 2, %s23
      %p266 = scmp.lt.s32.totalorder %s22, 1
      %s267 = scalar_select %p266, %s22, 1
      %p268 = scmp.lt.s32.totalorder %s265, 1
      %s269 = scalar_select %p268, %s265, 1
      %s270 = smul.addr %s267, 2
      %s271 = sadd.s32 %s269, %s270
      %s272 = smul.addr %s271, 4
      %s273 = scalar_lea.vmem %s5, %s272
      %p274 = pneg %p193
      %p275 = pneg %p190
      %s276 = smul.u32 2, %s23
      %p277 = scmp.lt.s32.totalorder %s22, 1
      %s278 = scalar_select %p277, %s22, 1
      %p279 = scmp.lt.s32.totalorder %s276, 1
      %s280 = scalar_select %p279, %s276, 1
      %s281 = smul.addr %s278, 2
      %s282 = sadd.s32 %s280, %s281
      %s283 = scalar_lea.vmem %s6, %s282
      %s284 = smul.u32 2, %s23
      %p285 = scmp.lt.s32.totalorder %s22, 1
      %s286 = scalar_select %p285, %s22, 1
      %p287 = scmp.lt.s32.totalorder %s284, 1
      %s288 = scalar_select %p287, %s284, 1
      %s289 = smul.addr %s286, 2
      %s290 = sadd.s32 %s288, %s289
      %s291 = smul.addr %s290, 4
      %s292 = scalar_lea.vmem %s0, %s291
      %s293 = smul.u32 2, %s23
      %s294 = smul.u32 2, %s23
      %p295 = scmp.lt.s32.totalorder %s22, 1
      %s296 = scalar_select %p295, %s22, 1
      %p297 = scmp.lt.s32.totalorder %s294, 1
      %s298 = scalar_select %p297, %s294, 1
      %s299 = smul.addr %s296, 2
      %s300 = sadd.s32 %s298, %s299
      %s301 = smul.addr %s300, 4
      %s302 = scalar_lea.vmem %s5, %s301
      %s303 = smul.u32 2, %s23
      %s304 = smul.u32 2, %s23
      %p305 = scmp.lt.s32.totalorder %s22, 1
      %s306 = scalar_select %p305, %s22, 1
      %p307 = scmp.lt.s32.totalorder %s304, 1
      %s308 = scalar_select %p307, %s304, 1
      %s309 = smul.addr %s306, 2
      %s310 = sadd.s32 %s308, %s309
      %s311 = scalar_lea.vmem %s6, %s310
      %s312 = smul.u32 2, %s23
      %v314 = vld [vmem:[%s292] sm:$0xff]
      %316 = vst [vmem:[#allocation1] ss:$2 sm:$0xff] %v314
      %v317 = vld.sshfl [vmem:[#allocation1] sm:$0xff pattern:$0x75316420]
      %v318 = vld.sshfl [vmem:[#allocation1 + $0x8] sm:$0xff pattern:$0x75316420]
      %v321 = vpack.c.bf16 %v317, %v317
      %v322 = vpack.c.bf16 %v318, %v318
      %v323 = vld [vmem:[%s1] sm:$0xf]
      %v324 = vld [vmem:[%s1 + $0x4] sm:$0xf]
      %v325 = vld [vmem:[%s1 + $0x8] sm:$0xf]
      %v326 = vld [vmem:[%s1 + $0xc] sm:$0xf]
      %v327 = vld [vmem:[%s2] sm:$0xff]
      %v328 = vld [vmem:[%s2 + $0x8] sm:$0xff]
      %v329 = vld [vmem:[%s2 + $0x10] sm:$0xff]
      %v330 = vld [vmem:[%s2 + $0x18] sm:$0xff]
      %332 = vset.pattern.permute.xlu0 0
      %333 = vperm.xlu0 %332, %v327
      %v334 = vpop.permute.xlu0 %333
      %337 = vset.pattern.permute.xlu0 0
      %338 = vperm.xlu0 %337, %v328
      %v339 = vpop.permute.xlu0 %338
      %342 = vset.pattern.permute.xlu0 0
      %343 = vperm.xlu0 %342, %v329
      %v344 = vpop.permute.xlu0 %343
      %347 = vset.pattern.permute.xlu0 0
      %348 = vperm.xlu0 %347, %v330
      %v349 = vpop.permute.xlu0 %348
      %v355 = vunpack.c.l.b16 %v323
      %v356 = vunpack.c.l.b16 %v324
      %v357 = vunpack.c.l.b16 %v325
      %v358 = vunpack.c.l.b16 %v326
      %v359 = vpack.c.b16 %v356, %v355
      %v360 = vpack.c.b16 %v358, %v357
      %vm361 = vcmask 31744
      %v363 = vsel %vm361, %v359, 0
      %v366 = vsel %vm361, %v360, 0
      %vm368 = vcmask 1041408
      %v370 = vsel %vm368, %v321, 0
      %v373 = vsel %vm368, %v322, 0
      %375 = vmatpush.bf16.msra.mxu0 0
      %376 = vmatpush.bf16.msra.mxu0 0
      %377 = vmatpush.bf16.msra.mxu0 0
      %378 = vmatpush.bf16.msra.mxu0 0
      %379 = vmatpush.bf16.msra.mxu0 0
      %380 = vmatpush.bf16.msra.mxu0 0
      %381 = vmatpush.bf16.msra.mxu0 0
      %382 = vmatpush.bf16.msra.mxu0 %v370
      %383 = vmatmul.bf16.gmra.mxu0 %v363
      %v384 = vpop.f32.mrf.mxu0
      %v385 = vadd.f32 %v334, %v384
      %v386 = vpop.f32.mrf.mxu0
      %v387 = vadd.f32 %v339, %v386
      %388 = vmatmul.bf16.gmra.mxu0 %v366
      %v389 = vpop.f32.mrf.mxu0
      %v390 = vadd.f32 %v344, %v389
      %v391 = vpop.f32.mrf.mxu0
      %v392 = vadd.f32 %v349, %v391
      %393 = vdwg.mxu0
      %394 = vmatpush.bf16.msra.mxu0 0
      %395 = vmatpush.bf16.msra.mxu0 0
      %396 = vmatpush.bf16.msra.mxu0 0
      %397 = vmatpush.bf16.msra.mxu0 0
      %398 = vmatpush.bf16.msra.mxu0 0
      %399 = vmatpush.bf16.msra.mxu0 0
      %400 = vmatpush.bf16.msra.mxu0 0
      %401 = vmatpush.bf16.msra.mxu0 %v373
      %402 = vmatmul.bf16.gmra.mxu0 %v363
      %v403 = vpop.f32.mrf.mxu0
      %v404 = vadd.f32 %v334, %v403
      %v405 = vpop.f32.mrf.mxu0
      %v406 = vadd.f32 %v339, %v405
      %407 = vmatmul.bf16.gmra.mxu0 %v366
      %v408 = vpop.f32.mrf.mxu0
      %v409 = vadd.f32 %v344, %v408
      %v410 = vpop.f32.mrf.mxu0
      %v411 = vadd.f32 %v349, %v410
      %412 = vdwg.mxu0
      %v413 = vmax.f32 %v385, 0.0
      %v414 = vmax.f32 %v404, 0.0
      %v415 = vmax.f32 %v387, 0.0
      %v416 = vmax.f32 %v406, 0.0
      %v417 = vmax.f32 %v390, 0.0
      %v418 = vmax.f32 %v409, 0.0
      %v419 = vmax.f32 %v392, 0.0
      %v420 = vmax.f32 %v411, 0.0
      %v421 = vld [vmem:[%s3] sm:$0xf]
      %v422 = vpack.c.bf16 %v415, %v413
      %v423 = vpack.c.bf16 %v416, %v414
      %v424 = vpack.c.bf16 %v419, %v417
      %v425 = vpack.c.bf16 %v420, %v418
      %v426 = vld [vmem:[%s4] sm:$0xff]
      %428 = vset.pattern.permute.xlu0 0
      %429 = vperm.xlu0 %428, %v426
      %v430 = vpop.permute.xlu0 %429
      %vm432 = vcmask 261120
      %v434 = vsel %vm432, %v421, 0
      %436 = vmatpush.bf16.msra.mxu0 0
      %437 = vmatpush.bf16.msra.mxu0 0
      %438 = vmatpush.bf16.msra.mxu0 0
      %439 = vmatpush.bf16.msra.mxu0 0
      %440 = vmatpush.bf16.msra.mxu0 0
      %441 = vmatpush.bf16.msra.mxu0 0
      %442 = vmatpush.bf16.msra.mxu0 %v424
      %443 = vmatpush.bf16.msra.mxu0 %v422
      %444 = vmatmul.bf16.gmra.mxu0 %v434
      %v445 = vpop.f32.mrf.mxu0
      %v446 = vadd.f32 %v430, %v445
      %v447 = vpop.f32.mrf.mxu0
      %448 = vdwg.mxu0
      %449 = vmatpush.bf16.msra.mxu0 0
      %450 = vmatpush.bf16.msra.mxu0 0
      %451 = vmatpush.bf16.msra.mxu0 0
      %452 = vmatpush.bf16.msra.mxu0 0
      %453 = vmatpush.bf16.msra.mxu0 0
      %454 = vmatpush.bf16.msra.mxu0 0
      %455 = vmatpush.bf16.msra.mxu0 %v425
      %456 = vmatpush.bf16.msra.mxu0 %v423
      %457 = vmatmul.bf16.gmra.mxu0 %v434
      %v458 = vpop.f32.mrf.mxu0
      %v459 = vadd.f32 %v430, %v458
      %v460 = vpop.f32.mrf.mxu0
      %461 = vdwg.mxu0
      %v462 = vpack.c.bf16 %v459, %v446
      %463 = vst [vmem:[%s302] sm:$0xff] %v462
      %v466 = vrot.slane %v446, 7
      %v467 = vrot.slane %v459, 7
      %vm470 = vcmp.gt.f32.partialorder %v446, %v466
      %vm471 = vcmp.gt.f32.partialorder %v459, %v467
      %v472 = vsel %vm470, %v446, %v466
      %v473 = vsel %vm471, %v459, %v467
      %v474 = vsel %vm470, 1, 0
      %v475 = vsel %vm471, 1, 0
      %v478 = vrot.slane %v472, 7
      %v479 = vrot.slane %v473, 7
      %vm482 = vcmp.gt.f32.partialorder %v446, %v478
      %vm483 = vcmp.gt.f32.partialorder %v459, %v479
      %v484 = vsel %vm482, %v446, %v478
      %v485 = vsel %vm483, %v459, %v479
      %v486 = vrot.slane %v474, 7
      %v487 = vrot.slane %v475, 7
      %v488 = vsel %vm482, 2, %v486
      %v489 = vsel %vm483, 2, %v487
      %v492 = vrot.slane %v484, 7
      %v493 = vrot.slane %v485, 7
      %vm496 = vcmp.gt.f32.partialorder %v446, %v492
      %vm497 = vcmp.gt.f32.partialorder %v459, %v493
      %v498 = vsel %vm496, %v446, %v492
      %v499 = vsel %vm497, %v459, %v493
      %v500 = vrot.slane %v488, 7
      %v501 = vrot.slane %v489, 7
      %v502 = vsel %vm496, 3, %v500
      %v503 = vsel %vm497, 3, %v501
      %v506 = vrot.slane %v498, 7
      %v507 = vrot.slane %v499, 7
      %vm510 = vcmp.gt.f32.partialorder %v446, %v506
      %vm511 = vcmp.gt.f32.partialorder %v459, %v507
      %v512 = vsel %vm510, %v446, %v506
      %v513 = vsel %vm511, %v459, %v507
      %v514 = vrot.slane %v502, 7
      %v515 = vrot.slane %v503, 7
      %v516 = vsel %vm510, 4, %v514
      %v517 = vsel %vm511, 4, %v515
      %v520 = vrot.slane %v512, 7
      %v521 = vrot.slane %v513, 7
      %vm524 = vcmp.gt.f32.partialorder %v446, %v520
      %vm525 = vcmp.gt.f32.partialorder %v459, %v521
      %v526 = vsel %vm524, %v446, %v520
      %v527 = vsel %vm525, %v459, %v521
      %v528 = vrot.slane %v516, 7
      %v529 = vrot.slane %v517, 7
      %v530 = vsel %vm524, 5, %v528
      %v531 = vsel %vm525, 5, %v529
      %v534 = vrot.slane %v526, 7
      %v535 = vrot.slane %v527, 7
      %vm538 = vcmp.gt.f32.partialorder %v446, %v534
      %vm539 = vcmp.gt.f32.partialorder %v459, %v535
      %v540 = vsel %vm538, %v446, %v534
      %v541 = vsel %vm539, %v459, %v535
      %v542 = vrot.slane %v530, 7
      %v543 = vrot.slane %v531, 7
      %v544 = vsel %vm538, 6, %v542
      %v545 = vsel %vm539, 6, %v543
      %v548 = vrot.slane %v540, 7
      %v549 = vrot.slane %v541, 7
      %vm552 = vcmp.gt.f32.partialorder %v446, %v548
      %vm553 = vcmp.gt.f32.partialorder %v459, %v549
      %v554 = vrot.slane %v544, 7
      %v555 = vrot.slane %v545, 7
      %v556 = vsel %vm552, 7, %v554
      %v557 = vsel %vm553, 7, %v555
      %v558 = vpack.c.b16 %v556, %v556
      %v559 = vpack.c.b8 %v558, %v558
      %v560 = vpack.c.b16 %v557, %v557
      %v561 = vpack.c.b8 %v560, %v560
      %563 = vst [vmem:[#allocation1] sm:$0xff] %v559
      %565 = vst [vmem:[#allocation1 + $0x9] sm:$0xff] %v561
      %s566 = scalar_lea.vmem [#allocation1], 1
      %v567 = vld [vmem:[%s566] ss:$9 sm:$0xff]
      %v568 = vshrl.u32 %v567, 24
      %v570 = vrot.slane %v568, 7
      %v571 = vrot.slane %v570, 1
      %vm572 = vcmask 1040384
      %vm573 = vsmask.f32 0
      %vm574 = vmand %vm572, %vm573
      %vm575 = vcmask 1041409
      %vm576 = vsmask.f32 1024
      %vm577 = vmand %vm575, %vm576
      %vm578 = vmor %vm577, %vm574
      %v579 = vld [vmem:[%s311] sm:$0x3]
      %v580 = vsel %vm578, %v571, %v579
      %581 = vst [vmem:[%s311] sm:$0x3] %v580
      %s582 = smul.u32 2, %s23
      %p583 = scmp.lt.s32.totalorder %s22, 1
      %s584 = scalar_select %p583, %s22, 1
      %p585 = scmp.lt.s32.totalorder %s582, 1
      %s586 = scalar_select %p585, %s582, 1
      %s587 = smul.addr %s584, 2
      %s588 = sadd.s32 %s586, %s587
      %s589 = smul.addr %s588, 4
      %s590 = scalar_lea.vmem %s5, %s589
      %s591 = smul.u32 2, %s23
      %p592 = scmp.lt.s32.totalorder %s22, 1
      %s593 = scalar_select %p592, %s22, 1
      %p594 = scmp.lt.s32.totalorder %s591, 1
      %s595 = scalar_select %p594, %s591, 1
      %s596 = smul.addr %s593, 2
      %s597 = sadd.s32 %s595, %s596
      %s598 = scalar_lea.vmem %s6, %s597
      // Predicated region
      $region41: #{_run_segmentor.1} parent=39 // pred_check
        %p599 = pneg %p162
      $region42: #{_run_segmentor.1} parent=39 // pred_check_branch
        %601 = sbr.rel (%p599) target = $region44
      $region43: #{_run_segmentor.1} parent=39 // pred_region
        %s602 = smul.u32 2, %s23
      $region44: #{_run_segmentor.1} parent=39 // pred_fallthru
        _
      // Predicated region
      $region45: #{_run_segmentor.1} parent=39 // pred_check
        %p603 = pneg %p190
      $region46: #{_run_segmentor.1} parent=39 // pred_check_branch
        %605 = sbr.rel (%p603) target = $region48
      $region47: #{_run_segmentor.1} parent=39 // pred_region
        %s606 = smul.u32 2, %s23
      $region48: #{_run_segmentor.1} parent=39 // pred_fallthru
        _
    $region40: #{_run_segmentor.1} parent=5 // pred_fallthru
      _
    %p607 = scmp.le.s32.totalorder 2, %s13
    // Predicated region
    $region49: #{_run_segmentor.1} parent=5 // pred_check
      %p608 = pneg %p607
    $region50: #{_run_segmentor.1} parent=5 // pred_check_branch
      %610 = sbr.rel (%p608) target = $region52
    $region51: #{_run_segmentor.1} parent=5 // pred_region
      %s611 = ssub.s32 %s13, 2
      // Predicated region
      $region53: #{_run_segmentor.1} parent=51 // pred_check
        %p612 = pneg %p168
      $region54: #{_run_segmentor.1} parent=51 // pred_check_branch
        %614 = sbr.rel (%p612) target = $region56
      $region55: #{_run_segmentor.1} parent=51 // pred_region
        %s615 = smul.u32 2, %s25
        %p616 = scmp.lt.s32.totalorder %s24, 1
        %s617 = scalar_select %p616, %s24, 1
        %p618 = scmp.lt.s32.totalorder %s615, 1
        %s619 = scalar_select %p618, %s615, 1
        %s620 = smul.addr %s617, 2
        %s621 = sadd.s32 %s619, %s620
        %s622 = smul.addr %s621, 4
        %s623 = scalar_lea.vmem %s5, %s622
      $region56: #{_run_segmentor.1} parent=51 // pred_fallthru
        _
      // Predicated region
      $region57: #{_run_segmentor.1} parent=51 // pred_check
        %p624 = pneg %p196
      $region58: #{_run_segmentor.1} parent=51 // pred_check_branch
        %626 = sbr.rel (%p624) target = $region60
      $region59: #{_run_segmentor.1} parent=51 // pred_region
        %s627 = smul.u32 2, %s25
        %p628 = scmp.lt.s32.totalorder %s24, 1
        %s629 = scalar_select %p628, %s24, 1
        %p630 = scmp.lt.s32.totalorder %s627, 1
        %s631 = scalar_select %p630, %s627, 1
        %s632 = smul.addr %s629, 2
        %s633 = sadd.s32 %s631, %s632
        %s634 = scalar_lea.vmem %s6, %s633
      $region60: #{_run_segmentor.1} parent=51 // pred_fallthru
        _
    $region52: #{_run_segmentor.1} parent=5 // pred_fallthru
      _
  $region6: #{_run_segmentor.1} parent=0 // loop_footer
    %s17 = sadd.s32 1, %s13
  $region7: #{_run_segmentor.1} parent=0 // loop_footer_branch
    %12 = sbr.rel target = $region3
  $region8: #{_run_segmentor.1} parent=0 // loop_exit
    _

</llo_original>
